<compile_context>
chip_gen: v6e
topology: v6e:2x2x1
jax: 0.10.0
libtpu: 0.0.40
codegen_flags: <defaults>
</compile_context>

<pallas_src>
import functools

import jax
import jax.numpy as jnp
from jax.experimental import pallas as pl
from jax.experimental.pallas import tpu as pltpu

LANE = 128


def _loc_net_kernel(h_ref, w_ref, b_ref, noise_ref,
                    mu_ref, lt_ref, size_ref, *, n_loc, n_size):
    """One fused MXU pass for fc_loc + fc_size; narrow per-head epilogues.

    h_ref:     (bB, D)      hidden state tile (f32)
    w_ref:     (D, 128)     packed weights: lanes [0:n_loc]=w_loc,
                            lanes [n_loc:n_loc+n_size]=w_size, rest zero
    b_ref:     (1, 128)     packed biases, same lane layout
    noise_ref: (bB, n_loc)  raw gaussian noise
    outputs:   mu (bB,n_loc), l_t (bB,n_loc), size_t (bB,n_size)
    """
    # Single MXU contraction covers both linear layers; bias broadcast over rows.
    z = jnp.dot(h_ref[...], w_ref[...],
                preferred_element_type=jnp.float32) + b_ref[...]     # (bB, 128)

    # Location head (lanes [0:n_loc]) — transcendental only on active lanes.
    mu = jnp.tanh(z[:, 0:n_loc])                       # (bB, n_loc)
    l_t = jnp.tanh(mu + noise_ref[...])                # (bB, n_loc)

    # Size head (lanes [n_loc:n_loc+n_size]) — narrow softmax, exact divide so
    # the probabilities sum to 1 (the approx reciprocal broke that guarantee).
    zs = z[:, n_loc:n_loc + n_size]                    # (bB, n_size)
    m = jnp.max(zs, axis=1, keepdims=True)
    e = jnp.exp(zs - m)
    size_t = e / jnp.sum(e, axis=1, keepdims=True)

    mu_ref[...] = mu
    lt_ref[...] = l_t
    size_ref[...] = size_t


def pack_weights(w_loc, b_loc, w_size, b_size):
    """Pack fc_loc / fc_size params into one (D,128) weight and one (1,128) bias."""
    d, o = w_loc.shape
    s = w_size.shape[1]
    assert o + s <= LANE
    w = jnp.zeros((d, LANE), jnp.float32)
    w = w.at[:, 0:o].set(w_loc.astype(jnp.float32))
    w = w.at[:, o:o + s].set(w_size.astype(jnp.float32))
    b = jnp.zeros((1, LANE), jnp.float32)
    b = b.at[0, 0:o].set(b_loc.astype(jnp.float32))
    b = b.at[0, o:o + s].set(b_size.astype(jnp.float32))
    return w, b


def _batch_dim_semantics(grid_b):
    """CORE_PARALLEL actually shards the batch grid across v7x's 2 TensorCores;
    plain "parallel" vs "arbitrary" is a measured no-op on 1-TC chips."""
    try:
        kind = jax.devices()[0].device_kind.lower()
    except Exception:  # interpret mode / no device info
        kind = ""
    if "v7" in kind and grid_b >= 2 and grid_b % 2 == 0:
        return (getattr(pltpu, "CORE_PARALLEL", "parallel"),)
    return ("parallel",)


def location_network_forward(h_t, w_packed, b_packed, noise, *,
                             n_loc=2, n_size=5, block_b=1024):
    """Returns (mu, l_t, size_t) = module forward given the same gaussian noise."""
    B, D = h_t.shape
    bb = min(block_b, B)          # big tile: mem/overhead-bound kernel
    grid_b = pl.cdiv(B, bb)
    kernel = functools.partial(_loc_net_kernel, n_loc=n_loc, n_size=n_size)

    out_shape = (
        jax.ShapeDtypeStruct((B, n_loc), jnp.float32),
        jax.ShapeDtypeStruct((B, n_loc), jnp.float32),
        jax.ShapeDtypeStruct((B, n_size), jnp.float32),
    )

    mu, l_t, size_t = pl.pallas_call(
        kernel,
        out_shape=out_shape,
        grid_spec=pltpu.PrefetchScalarGridSpec(
            num_scalar_prefetch=0,
            grid=(grid_b,),
            in_specs=[
                pl.BlockSpec((bb, D), lambda i: (i, 0)),        # h_t
                pl.BlockSpec((D, LANE), lambda i: (0, 0)),      # packed W
                pl.BlockSpec((1, LANE), lambda i: (0, 0)),      # packed bias
                pl.BlockSpec((bb, n_loc), lambda i: (i, 0)),    # raw noise
            ],
            out_specs=[
                pl.BlockSpec((bb, n_loc), lambda i: (i, 0)),    # mu
                pl.BlockSpec((bb, n_loc), lambda i: (i, 0)),    # l_t
                pl.BlockSpec((bb, n_size), lambda i: (i, 0)),   # size_t
            ],
        ),
        compiler_params=pltpu.CompilerParams(
            dimension_semantics=_batch_dim_semantics(grid_b)),
    )(h_t, w_packed, b_packed, noise)
    return mu, l_t, size_t


def init_params(key, input_size, output_size):
    """Deterministic init mimicking nn.Linear's uniform(-1/sqrt(in), 1/sqrt(in))."""
    k1, k2, k3, k4 = jax.random.split(key, 4)
    bound = 1.0 / jnp.sqrt(jnp.float32(input_size))
    w_loc = jax.random.uniform(k1, (input_size, output_size), jnp.float32,
                               -bound, bound)
    b_loc = jax.random.uniform(k2, (output_size,), jnp.float32, -bound, bound)
    w_size = jax.random.uniform(k3, (input_size, 5), jnp.float32, -bound, bound)
    b_size = jax.random.uniform(k4, (5,), jnp.float32, -bound, bound)
    return w_loc, b_loc, w_size, b_size


if __name__ == "__main__":
    input_size = 32      # hidden size of the core network
    output_size = 2      # 2D location means
    n_size = 5
    std = 0.17

    key = jax.random.PRNGKey(0)
    k_h, k_p, k_n, k_h2, k_n2 = jax.random.split(key, 5)

    w_loc, b_loc, w_size, b_size = init_params(k_p, input_size, output_size)
    w_packed, b_packed = pack_weights(w_loc, b_loc, w_size, b_size)

    hi = jax.lax.Precision.HIGHEST

    def reference(h, noise):
        mu_r = jnp.tanh(jnp.dot(h, w_loc, precision=hi) + b_loc)
        lt_r = jnp.tanh(mu_r + noise)
        size_r = jax.nn.softmax(jnp.dot(h, w_size, precision=hi) + b_size, axis=1)
        return mu_r, lt_r, size_r

    def check(mu, l_t, size_t, h, noise):
        mu_r, lt_r, size_r = reference(h, noise)
        # 5e-3 tolerance covers MXU / XLA matmul-precision differences between
        # the kernel and the reference; layout/semantic bugs are O(0.1-1).
        assert jnp.allclose(mu, mu_r, atol=5e-3), "mu mismatch"
        assert jnp.allclose(l_t, lt_r, atol=5e-3), "l_t mismatch"
        assert jnp.allclose(size_t, size_r, atol=5e-3), "size_t mismatch"
        # exact divide in the kernel softmax -> normalized to float rounding.
        assert jnp.allclose(jnp.sum(size_t, axis=1), 1.0, atol=1e-3), "softmax norm"

    # --- tiny batch matching the module's typical use (B=2), single block ---
    B = 2
    h_t = jax.random.normal(k_h, (B, input_size), jnp.float32)
    noise = std * jax.random.normal(k_n, (B, output_size), jnp.float32)
    mu, l_t, size_t = location_network_forward(
        h_t, w_packed, b_packed, noise, n_loc=output_size, n_size=n_size)
    jax.block_until_ready((mu, l_t, size_t))
    check(mu, l_t, size_t, h_t, noise)

    # --- batched path: exercises the tiled grid (2 tiles of 256 rows) ---
    B2 = 512
    h2 = jax.random.normal(k_h2, (B2, input_size), jnp.float32)
    noise2 = std * jax.random.normal(k_n2, (B2, output_size), jnp.float32)
    mu2, lt2, size2 = location_network_forward(
        h2, w_packed, b_packed, noise2, n_loc=output_size, n_size=n_size,
        block_b=256)
    jax.block_until_ready((mu2, lt2, size2))
    check(mu2, lt2, size2, h2, noise2)

    print("KERNEL_OK")
</pallas_src>

<mosaic_0001>
module attributes {stable_mosaic.version = 11 : i64} {
  func.func @_loc_net_kernel(%arg0: i32, %arg1: memref<2x32xf32, #tpu.memory_space<vmem>>, %arg2: memref<32x128xf32, #tpu.memory_space<vmem>>, %arg3: memref<1x128xf32, #tpu.memory_space<vmem>>, %arg4: memref<2x2xf32, #tpu.memory_space<vmem>>, %arg5: memref<2x2xf32, #tpu.memory_space<vmem>>, %arg6: memref<2x2xf32, #tpu.memory_space<vmem>>, %arg7: memref<2x5xf32, #tpu.memory_space<vmem>>) attributes {dimension_semantics = [#tpu.dimension_semantics<parallel>], iteration_bounds = array<i64: 1>, scalar_prefetch = 0 : i64, scratch_operands = 0 : i64, tpu.core_type = #tpu.core_type<tc>, window_params = [{transform_indices = @transform_0, window_bounds = array<i64: 2, 32>}, {pipeline_mode = #tpu.pipeline_mode<synchronous>, transform_indices = @transform_1, window_bounds = array<i64: 32, 128>}, {pipeline_mode = #tpu.pipeline_mode<synchronous>, transform_indices = @transform_2, window_bounds = array<i64: 1, 128>}, {transform_indices = @transform_3, window_bounds = array<i64: 2, 2>}, {transform_indices = @transform_4, window_bounds = array<i64: 2, 2>}, {transform_indices = @transform_5, window_bounds = array<i64: 2, 2>}, {transform_indices = @transform_6, window_bounds = array<i64: 2, 5>}]} {
    %c0 = arith.constant 0 : index
    %c0_0 = arith.constant 0 : index
    %0 = vector.load %arg1[%c0, %c0_0] : memref<2x32xf32, #tpu.memory_space<vmem>>, vector<2x32xf32>
    %c0_1 = arith.constant 0 : index
    %c0_2 = arith.constant 0 : index
    %1 = vector.load %arg2[%c0_1, %c0_2] : memref<32x128xf32, #tpu.memory_space<vmem>>, vector<32x128xf32>
    %cst = arith.constant dense<0.000000e+00> : vector<2x128xf32>
    %2 = tpu.matmul %0, %1, %cst {dimension_numbers = #tpu.dot_dimension_numbers<[1], [0], [0], [1], [0, 0, 1, 1], [], []>} : vector<2x32xf32>, vector<32x128xf32>, vector<2x128xf32> -> vector<2x128xf32>
    %c0_3 = arith.constant 0 : index
    %c0_4 = arith.constant 0 : index
    %3 = vector.load %arg3[%c0_3, %c0_4] : memref<1x128xf32, #tpu.memory_space<vmem>>, vector<1x128xf32>
    %4 = vector.broadcast %3 : vector<1x128xf32> to vector<2x128xf32>
    %5 = arith.addf %2, %4 : vector<2x128xf32>
    %6 = vector.extract_strided_slice %5 {offsets = [0, 0], sizes = [2, 2], strides = [1, 1]} : vector<2x128xf32> to vector<2x2xf32>
    %7 = math.tanh %6 : vector<2x2xf32>
    %c0_5 = arith.constant 0 : index
    %c0_6 = arith.constant 0 : index
    %8 = vector.load %arg4[%c0_5, %c0_6] : memref<2x2xf32, #tpu.memory_space<vmem>>, vector<2x2xf32>
    %9 = arith.addf %7, %8 : vector<2x2xf32>
    %10 = math.tanh %9 : vector<2x2xf32>
    %11 = vector.extract_strided_slice %5 {offsets = [0, 2], sizes = [2, 5], strides = [1, 1]} : vector<2x128xf32> to vector<2x5xf32>
    %cst_7 = arith.constant dense<0xFF800000> : vector<2xf32>
    %12 = vector.multi_reduction <maximumf>, %11, %cst_7 [1] : vector<2x5xf32> to vector<2xf32>
    %13 = vector.shape_cast %12 : vector<2xf32> to vector<2x1xf32>
    %14 = vector.broadcast %13 : vector<2x1xf32> to vector<2x5xf32>
    %15 = arith.subf %11, %14 : vector<2x5xf32>
    %16 = math.exp %15 : vector<2x5xf32>
    %cst_8 = arith.constant dense<0.000000e+00> : vector<2xf32>
    %17 = vector.multi_reduction <add>, %16, %cst_8 [1] : vector<2x5xf32> to vector<2xf32>
    %18 = vector.shape_cast %17 : vector<2xf32> to vector<2x1xf32>
    %19 = vector.broadcast %18 : vector<2x1xf32> to vector<2x5xf32>
    %20 = arith.divf %16, %19 : vector<2x5xf32>
    %c0_9 = arith.constant 0 : index
    %c0_10 = arith.constant 0 : index
    %21 = vector.load %arg5[%c0_9, %c0_10] : memref<2x2xf32, #tpu.memory_space<vmem>>, vector<2x2xf32>
    tpu.vector_store %arg5[%c0_9, %c0_10], %7 {strides = array<i32>} : memref<2x2xf32, #tpu.memory_space<vmem>>, vector<2x2xf32>,
    %c0_11 = arith.constant 0 : index
    %c0_12 = arith.constant 0 : index
    %22 = vector.load %arg6[%c0_11, %c0_12] : memref<2x2xf32, #tpu.memory_space<vmem>>, vector<2x2xf32>
    tpu.vector_store %arg6[%c0_11, %c0_12], %10 {strides = array<i32>} : memref<2x2xf32, #tpu.memory_space<vmem>>, vector<2x2xf32>,
    %c0_13 = arith.constant 0 : index
    %c0_14 = arith.constant 0 : index
    %23 = vector.load %arg7[%c0_13, %c0_14] : memref<2x5xf32, #tpu.memory_space<vmem>>, vector<2x5xf32>
    tpu.vector_store %arg7[%c0_13, %c0_14], %20 {strides = array<i32>} : memref<2x5xf32, #tpu.memory_space<vmem>>, vector<2x5xf32>,
    return
  }
  func.func @transform_0(%arg0: i32) -> (i32, i32) {
    %c0_i32 = arith.constant 0 : i32
    %c0_i32_0 = arith.constant 0 : i32
    return %arg0, %c0_i32 : i32, i32
  }
  func.func @transform_1(%arg0: i32) -> (i32, i32) {
    %c0_i32 = arith.constant 0 : i32
    %c0_i32_0 = arith.constant 0 : i32
    %c0_i32_1 = arith.constant 0 : i32
    return %c0_i32, %c0_i32_0 : i32, i32
  }
  func.func @transform_2(%arg0: i32) -> (i32, i32) {
    %c0_i32 = arith.constant 0 : i32
    %c0_i32_0 = arith.constant 0 : i32
    %c0_i32_1 = arith.constant 0 : i32
    return %c0_i32, %c0_i32_0 : i32, i32
  }
  func.func @transform_3(%arg0: i32) -> (i32, i32) {
    %c0_i32 = arith.constant 0 : i32
    %c0_i32_0 = arith.constant 0 : i32
    return %arg0, %c0_i32 : i32, i32
  }
  func.func @transform_4(%arg0: i32) -> (i32, i32) {
    %c0_i32 = arith.constant 0 : i32
    %c0_i32_0 = arith.constant 0 : i32
    return %arg0, %c0_i32 : i32, i32
  }
  func.func @transform_5(%arg0: i32) -> (i32, i32) {
    %c0_i32 = arith.constant 0 : i32
    %c0_i32_0 = arith.constant 0 : i32
    return %arg0, %c0_i32 : i32, i32
  }
  func.func @transform_6(%arg0: i32) -> (i32, i32) {
    %c0_i32 = arith.constant 0 : i32
    %c0_i32_0 = arith.constant 0 : i32
    return %arg0, %c0_i32 : i32, i32
  }
}

</mosaic_0001>

<llo_original>
// kernel: tpu_custom_call.1
$region0: #{tpu_custom_call.1}
  #allocation0 [shape = 'u32[]', space=smem, size = 0x4, offset = 0x4, fixed_abs, tag = 'smem constant byte address 0x4 - core index']
  #allocation1 [shape = 'u32[144,128]{1,0:T(1,128)}', space=vmem, size = 0x12000, scoped, tag = 'internal scratch']
  %s0 = inlined_call_operand.hbm [shape: f32[2,32], index: 0, kind: input, shape index: {}]
  %s1 = inlined_call_operand.hbm [shape: f32[32,128], index: 1, kind: input, shape index: {}]
  %s2 = inlined_call_operand.vmem [shape: f32[1,128], index: 2, kind: input, shape index: {}]
  %s3 = inlined_call_operand.vmem [shape: f32[2,2], index: 3, kind: input, shape index: {}]
  %s4 = inlined_call_operand.hbm [shape: f32[2,2], index: 4, kind: output, shape index: {0}]
  %s5 = inlined_call_operand.hbm [shape: f32[2,2], index: 5, kind: output, shape index: {1}]
  %s6 = inlined_call_operand.hbm [shape: f32[2,5], index: 6, kind: output, shape index: {2}]
  %7 = xla_tuple %s4, %s5, %s6
  %s8 = sld [smem:[#allocation0]]
  $region50: #{tpu_custom_call.1} parent=0
    _
  %s10 = ssub.s32 1, %s8
  %s11 = scalar_select 0, %s10, %s8
  $region1: #{tpu_custom_call.1} parent=0
    #allocation2 [shape = 'u8[1024]{0}', space=vmem, size = 0x400, scoped, tag = 'input window, operand 0, single buffered']
    #allocation3 [shape = 's32[1]{0}', space=sflag, size = 0x4, scoped, tag = 'scoped memory for tpu_custom_call.1']
    #allocation4 [shape = 's32[1]{0}', space=sflag, size = 0x4, scoped, tag = 'scoped memory for tpu_custom_call.1']
    #allocation5 [shape = 'u8[16384]{0}', space=vmem, size = 0x4000, scoped, tag = 'input window, operand 1, single buffered']
    #allocation6 [shape = 's32[1]{0}', space=sflag, size = 0x4, scoped, tag = 'scoped memory for tpu_custom_call.1']
    #allocation7 [shape = 'u8[1024]{0}', space=vmem, size = 0x400, scoped, tag = 'output window, operand 0, single buffered']
    #allocation8 [shape = 'u8[1024]{0}', space=vmem, size = 0x400, scoped, tag = 'output window, operand 1, single buffered']
    #allocation9 [shape = 's32[1]{0}', space=sflag, size = 0x4, scoped, tag = 'scoped memory for tpu_custom_call.1']
    #allocation10 [shape = 'u8[1024]{0}', space=vmem, size = 0x400, scoped, tag = 'output window, operand 2, single buffered']
    %12 = vsyncpa [#allocation3], 0
    %13 = vsyncpa [#allocation6], 0
    %14 = vsyncpa [#allocation4], 0
    %15 = vsyncpa [#allocation9], 0
    // Predicated region
    $region2: #{tpu_custom_call.1} parent=1 // pred_check
      _
    $region3: #{tpu_custom_call.1} parent=1 // pred_check_branch
      %17 = sbr.rel (0) target = $region5
    $region4: #{tpu_custom_call.1} parent=1 // pred_region
      %s19 = ssub.s32 32, 32
      %20 = vsyncadd [#allocation3], %s19
      %s22 = sshll.u32 [#allocation2], 4
      %s23 = int_to_ptr.vmem [resolvable:$true] %s22
      %25 = dma.hbm_to_vmem [thread:$0]  %s0, 32, %s23, [#allocation3]
    $region5: #{tpu_custom_call.1} parent=1 // pred_fallthru
      _
    // Predicated region
    $region6: #{tpu_custom_call.1} parent=1 // pred_check
      _
    $region7: #{tpu_custom_call.1} parent=1 // pred_check_branch
      %27 = sbr.rel (0) target = $region9
    $region8: #{tpu_custom_call.1} parent=1 // pred_region
      %s29 = ssub.s32 512, 512
      %30 = vsyncadd [#allocation6], %s29
      %s31 = sshll.u32 [#allocation5], 4
      %s32 = int_to_ptr.vmem [resolvable:$true] %s31
      %37 = dma.hbm_to_vmem [thread:$0]  %s1, 512, %s32, [#allocation6], 128, 128, 8
    $region9: #{tpu_custom_call.1} parent=1 // pred_fallthru
      _
    // Predicated region
    $region10: #{tpu_custom_call.1} parent=1 // pred_check
      _
    $region11: #{tpu_custom_call.1} parent=1 // pred_check_branch
      %39 = sbr.rel (0) target = $region13
    $region12: #{tpu_custom_call.1} parent=1 // pred_region
      _
    $region13: #{tpu_custom_call.1} parent=1 // pred_fallthru
      _
    // Predicated region
    $region14: #{tpu_custom_call.1} parent=1 // pred_check
      _
    $region15: #{tpu_custom_call.1} parent=1 // pred_check_branch
      %41 = sbr.rel (0) target = $region17
    $region16: #{tpu_custom_call.1} parent=1 // pred_region
      _
    $region17: #{tpu_custom_call.1} parent=1 // pred_fallthru
      _
    // Predicated region
    $region18: #{tpu_custom_call.1} parent=1 // pred_check
      _
    $region19: #{tpu_custom_call.1} parent=1 // pred_check_branch
      %43 = sbr.rel (0) target = $region21
    $region20: #{tpu_custom_call.1} parent=1 // pred_region
      %44 = dma.done [#allocation3], 32
    $region21: #{tpu_custom_call.1} parent=1 // pred_fallthru
      _
    // Predicated region
    $region22: #{tpu_custom_call.1} parent=1 // pred_check
      _
    $region23: #{tpu_custom_call.1} parent=1 // pred_check_branch
      %46 = sbr.rel (0) target = $region25
    $region24: #{tpu_custom_call.1} parent=1 // pred_region
      %47 = dma.done [#allocation6], 512
    $region25: #{tpu_custom_call.1} parent=1 // pred_fallthru
      _
    %v48 = vld [vmem:[#allocation2] sm:$0x3]
    %v49 = vld [vmem:[#allocation5] sm:$0xff]
    %v50 = vld [vmem:[#allocation5 + $0x8] sm:$0xff]
    %v51 = vld [vmem:[#allocation5 + $0x10] sm:$0xff]
    %v52 = vld [vmem:[#allocation5 + $0x18] sm:$0xff]
    %v53 = vld [vmem:[%s2] sm:$0x1]
    %v55 = vlaneseq
    %v56 = vshrl.u32 %v55, 7
    %v57 = vsub.s32 0, %v56
    %v58 = vrot.slane %v53, %v57
    %vm60 = vcmask 261120
    %v62 = vsel %vm60, %v48, 0
    %64 = vmatprep.subr.mxu0 0.0
    %65 = vmatpush1.msra.mxu0 0.0
    %66 = vmatprep.subr.mxu0 0.0
    %67 = vmatpush1.msra.mxu0 0.0
    %68 = vmatprep.subr.mxu0 0.0
    %69 = vmatpush1.msra.mxu0 0.0
    %70 = vmatprep.subr.mxu0 0.0
    %71 = vmatpush1.msra.mxu0 0.0
    %72 = vmatprep.subr.mxu0 0.0
    %73 = vmatpush1.msra.mxu0 0.0
    %74 = vmatprep.subr.mxu0 0.0
    %75 = vmatpush1.msra.mxu0 0.0
    %76 = vmatprep.subr.mxu0 0.0
    %77 = vmatpush1.msra.mxu0 0.0
    %78 = vmatprep.subr.mxu0 0.0
    %79 = vmatpush1.msra.mxu0 0.0
    %80 = vmatprep.subr.mxu0 0.0
    %81 = vmatpush1.msra.mxu0 0.0
    %82 = vmatprep.subr.mxu0 0.0
    %83 = vmatpush1.msra.mxu0 0.0
    %84 = vmatprep.subr.mxu0 0.0
    %85 = vmatpush1.msra.mxu0 0.0
    %86 = vmatprep.subr.mxu0 0.0
    %87 = vmatpush1.msra.mxu0 0.0
    %88 = vmatprep.subr.mxu0 0.0
    %89 = vmatpush1.msra.mxu0 %v52
    %90 = vmatprep.subr.mxu0 0.0
    %91 = vmatpush1.msra.mxu0 %v51
    %92 = vmatprep.subr.mxu0 0.0
    %93 = vmatpush1.msra.mxu0 %v50
    %94 = vmatprep.subr.mxu0 0.0
    %95 = vmatpush1.msra.mxu0 %v49
    %96 = vmatprep.subr.mxu0 0.0
    %97 = vmatpush2.msra.mxu0 0.0
    %98 = vmatprep.subr.mxu0 0.0
    %99 = vmatpush2.msra.mxu0 0.0
    %100 = vmatprep.subr.mxu0 0.0
    %101 = vmatpush2.msra.mxu0 0.0
    %102 = vmatprep.subr.mxu0 0.0
    %103 = vmatpush2.msra.mxu0 0.0
    %104 = vmatprep.subr.mxu0 0.0
    %105 = vmatpush2.msra.mxu0 0.0
    %106 = vmatprep.subr.mxu0 0.0
    %107 = vmatpush2.msra.mxu0 0.0
    %108 = vmatprep.subr.mxu0 0.0
    %109 = vmatpush2.msra.mxu0 0.0
    %110 = vmatprep.subr.mxu0 0.0
    %111 = vmatpush2.msra.mxu0 0.0
    %112 = vmatprep.subr.mxu0 0.0
    %113 = vmatpush2.msra.mxu0 0.0
    %114 = vmatprep.subr.mxu0 0.0
    %115 = vmatpush2.msra.mxu0 0.0
    %116 = vmatprep.subr.mxu0 0.0
    %117 = vmatpush2.msra.mxu0 0.0
    %118 = vmatprep.subr.mxu0 0.0
    %119 = vmatpush2.msra.mxu0 0.0
    %120 = vmatprep.subr.mxu0 0.0
    %121 = vmatpush2.msra.mxu0 0.0
    %122 = vmatprep.subr.mxu0 0.0
    %123 = vmatpush2.msra.mxu0 0.0
    %124 = vmatprep.subr.mxu0 0.0
    %125 = vmatpush2.msra.mxu0 0.0
    %126 = vmatprep.subr.mxu0 0.0
    %127 = vmatpush2.msra.mxu0 0.0
    %128 = vmatprep.mubr.f32.mxu0 0.0
    %129 = vmatmul.mubr.f32.gmra.mxu0 %v62
    %v130 = vpop.f32.mrf.mxu0
    %v131 = vadd.f32 %v58, %v130
    %v132 = vpop.f32.mrf.mxu0
    %133 = vdwg.mxu0
    %v134 = vtanh.pop %v131
    %v135 = vld [vmem:[%s3] sm:$0x3]
    %v136 = vadd.f32 %v134, %v135
    %v137 = vtanh.pop %v136
    %vm138 = vcmask 50192
    %v139 = vsel %vm138, %v131, -inf
    %140 = vmax.xlane.f32.xlu0 %v139
    %v141 = vpop.xlane.xlu0 %140
    %v142 = vsub.f32 %v131, %v141
    %v143 = vmul.f32 %v142, 1.442695
    %v144 = vpow.pop %v143
    %146 = vrot.lane.b32.xlu0 %v144, 126
    %v147 = vpop.permute.xlu0 %146
    %vm149 = vcmask 33792
    %v150 = vsel %vm149, %v147, 0.0
    %151 = vadd.xlane.f32.xlu0 %v150
    %v152 = vpop.xlane.xlu0 %151
    %v153 = vrcp.pop %v152
    %v154 = vmul.f32 %v144, %v153
    %vm155 = vcmask 9216
    %156 = vst.msk [vmem:[#allocation7] sm:$0x3] %vm155, %v134
    %157 = vst.msk [vmem:[#allocation8] sm:$0x3] %vm155, %v137
    %159 = vrot.lane.b32.xlu0 %v154, 126
    %v160 = vpop.permute.xlu0 %159
    %162 = vst.msk [vmem:[#allocation10] sm:$0x3] %vm149, %v160
    // Predicated region
    $region26: #{tpu_custom_call.1} parent=1 // pred_check
      _
    $region27: #{tpu_custom_call.1} parent=1 // pred_check_branch
      %164 = sbr.rel (0) target = $region29
    $region28: #{tpu_custom_call.1} parent=1 // pred_region
      %s166 = ssub.s32 32, 32
      %167 = vsyncadd [#allocation4], %s166
      %s169 = sshll.u32 [#allocation7], 4
      %s170 = int_to_ptr.vmem [resolvable:$true] %s169
      %172 = dma.vmem_to_hbm [thread:$0]  %s170, 32, %s4, [#allocation4]
    $region29: #{tpu_custom_call.1} parent=1 // pred_fallthru
      _
    // Predicated region
    $region30: #{tpu_custom_call.1} parent=1 // pred_check
      _
    $region31: #{tpu_custom_call.1} parent=1 // pred_check_branch
      %174 = sbr.rel (0) target = $region33
    $region32: #{tpu_custom_call.1} parent=1 // pred_region
      %s176 = ssub.s32 32, 32
      %177 = vsyncadd [#allocation9], %s176
      %s179 = sshll.u32 [#allocation8], 4
      %s180 = int_to_ptr.vmem [resolvable:$true] %s179
      %182 = dma.vmem_to_hbm [thread:$0]  %s180, 32, %s5, [#allocation9]
    $region33: #{tpu_custom_call.1} parent=1 // pred_fallthru
      _
    // Predicated region
    $region34: #{tpu_custom_call.1} parent=1 // pred_check
      _
    $region35: #{tpu_custom_call.1} parent=1 // pred_check_branch
      %184 = sbr.rel (0) target = $region37
    $region36: #{tpu_custom_call.1} parent=1 // pred_region
      %s186 = ssub.s32 32, 32
      %187 = vsyncadd [#allocation9], %s186
      %s189 = sshll.u32 [#allocation10], 4
      %s190 = int_to_ptr.vmem [resolvable:$true] %s189
      %192 = dma.vmem_to_hbm [thread:$0]  %s190, 32, %s6, [#allocation9]
    $region37: #{tpu_custom_call.1} parent=1 // pred_fallthru
      _
    // Predicated region
    $region38: #{tpu_custom_call.1} parent=1 // pred_check
      _
    $region39: #{tpu_custom_call.1} parent=1 // pred_check_branch
      %194 = sbr.rel (0) target = $region41
    $region40: #{tpu_custom_call.1} parent=1 // pred_region
      %195 = dma.done [#allocation4], 32
    $region41: #{tpu_custom_call.1} parent=1 // pred_fallthru
      _
    // Predicated region
    $region42: #{tpu_custom_call.1} parent=1 // pred_check
      _
    $region43: #{tpu_custom_call.1} parent=1 // pred_check_branch
      %197 = sbr.rel (0) target = $region45
    $region44: #{tpu_custom_call.1} parent=1 // pred_region
      %198 = dma.done [#allocation9], 32
    $region45: #{tpu_custom_call.1} parent=1 // pred_fallthru
      _
    // Predicated region
    $region46: #{tpu_custom_call.1} parent=1 // pred_check
      _
    $region47: #{tpu_custom_call.1} parent=1 // pred_check_branch
      %200 = sbr.rel (0) target = $region49
    $region48: #{tpu_custom_call.1} parent=1 // pred_region
      %201 = dma.done [#allocation9], 32
    $region49: #{tpu_custom_call.1} parent=1 // pred_fallthru
      _
    %202 = vsyncpa [#allocation3], 1
    %203 = vsyncpa [#allocation6], 1
    %204 = vsyncpa [#allocation4], 1
    %205 = vsyncpa [#allocation9], 1

</llo_original>
